<compile_context>
chip_gen: v6e
topology: v6e:2x2x1
jax: 0.10.0
libtpu: 0.0.40
codegen_flags: <defaults>
</compile_context>

<pallas_src>
import functools

import jax
import jax.numpy as jnp
from jax import lax
from jax.experimental import pallas as pl
from jax.experimental.pallas import tpu as pltpu


def _attention2d_freq_kernel(x_ref, w1_ref, b1_ref, w2_ref, b2_ref, o_ref, *,
                             k1, k2, hidden, nb, seg_len, inv_temp,
                             compute_dtype):
    # x_ref: (C*F, L) with L = (batch segments in this block) * T on the lane axis.
    _, L = x_ref.shape

    pad1 = (k1 - 1) // 2
    pad2 = (k2 - 1) // 2

    # Within-segment time index + edge masks, built once and shared by both convs
    # (keeps the 'same' zero padding from leaking across batch segments folded
    # onto the lane axis).  For k=3 there are only two masks: d=-1 and d=+1.
    t_idx = lax.broadcasted_iota(jnp.int32, (1, L), 1) % seg_len
    shifts = sorted({kk - pad1 for kk in range(k1)}
                    | {kk - pad2 for kk in range(k2)})
    masks = {d: jnp.logical_and(t_idx + d >= 0, t_idx + d < seg_len)
             for d in shifts if d != 0}

    def conv_same(z_all, k, n_out):
        # z_all: (k*n_out, L) stacked per-tap matmul result.  Combine taps by
        # rolling each row-group on the lane axis (XLU) and masking segment edges.
        pad = (k - 1) // 2
        acc = z_all[pad * n_out:(pad + 1) * n_out, :]          # d == 0 tap
        for kk in range(k):
            d = kk - pad
            if d == 0:
                continue
            z = z_all[kk * n_out:(kk + 1) * n_out, :]
            z = pltpu.roll(z, shift=(-d) % L, axis=1)          # out[:,t]=z[:,(t+d)%L]
            acc = acc + jnp.where(masks[d], z, 0.0)
        return acc

    # ---- conv1d1 (+BN and 1/F freq-mean folded into the weights), taps stacked
    # into ONE (k1*hidden, C*F)x(C*F, L) MXU matmul, f32 accumulation ----
    x = x_ref[...].astype(compute_dtype)                       # no-op if already bf16
    z1 = jnp.dot(w1_ref[...], x, preferred_element_type=jnp.float32)
    h = jnp.maximum(conv_same(z1, k1, hidden) + b1_ref[...], 0.0)

    # ---- conv1d2 (taps stacked), bias, temperature scale ----
    z2 = jnp.dot(w2_ref[...], h.astype(compute_dtype),
                 preferred_element_type=jnp.float32)
    logits = (conv_same(z2, k2, nb) + b2_ref[...]) * inv_temp

    # ---- softmax over the basis axis (dim=1 of the torch output) ----
    m = jnp.max(logits, axis=0, keepdims=True)
    e = jnp.exp(logits - m)
    denom = jnp.sum(e, axis=0, keepdims=True)
    o_ref[...] = (e * pl.reciprocal(denom, approx=True)).astype(o_ref.dtype)


def attention2d_freq(x, params, *, temperature, eps=1e-5, num_l_blocks=1,
                     input_dtype=None, compute_dtype=jnp.bfloat16,
                     vmem_limit_bytes=None):
    """pool_dim='freq' path of attention2d.forward. Returns (B, nb, 1, T, 1).

    num_l_blocks : split B*T into lane blocks ("parallel" grid axis).  Keep 1 at
        tiny sizes; use >=2 on v7x (2 TensorCores) once each block has >=a few
        x128 lanes.  Requires (B*T) % num_l_blocks == 0 and the block to be a
        multiple of 128 and of T.
    input_dtype  : e.g. jnp.bfloat16 to halve the HBM->VMEM DMA for x.
    compute_dtype: dtype of the MXU operands (accumulation is always f32).
    """
    B, C, T, F = x.shape
    w1 = params["w1"]                        # (hidden, C, k1)
    w2 = params["w2"]                        # (nb, hidden, k2)
    hidden, _, k1 = w1.shape
    nb, _, k2 = w2.shape
    assert k1 % 2 == 1 and k2 % 2 == 1, "even kernel sizes not supported"

    # ---- fold BatchNorm1d (inference / running stats) AND the 1/F freq mean
    # into conv1d1's weights / bias ----
    scale = params["bn_gamma"] * lax.rsqrt(params["bn_var"] + eps)        # (hidden,)
    w1f = (w1 * scale[:, None, None] / float(F)).astype(jnp.float32)      # (hidden,C,k1)
    b1 = (params["bn_beta"] - params["bn_mean"] * scale).reshape(hidden, 1)
    b1 = b1.astype(jnp.float32)
    b2 = params["b2"].reshape(nb, 1).astype(jnp.float32)

    CF = C * F
    # Stacked tap weights: rows grouped per tap.
    #   w1s[kk*hidden + h, c*F + f] = w1[h,c,kk]*scale[h]/F   (replicated over f)
    #   w2s[kk*nb + n, h]           = w2[n,h,kk]
    w1s = jnp.broadcast_to(jnp.transpose(w1f, (2, 0, 1))[:, :, :, None],
                           (k1, hidden, C, F)).reshape(k1 * hidden, CF)
    w2s = jnp.transpose(w2, (2, 0, 1)).reshape(k2 * nb, hidden)
    w1s = w1s.astype(compute_dtype)
    w2s = w2s.astype(compute_dtype)

    # ---- layout: time on the lane axis, batch folded onto it, (C,F) on sublanes
    # (B, C, T, F) -> (C*F, B*T) ----
    L = B * T
    xT = jnp.transpose(x, (1, 3, 0, 2)).reshape(CF, L)
    if input_dtype is not None:
        xT = xT.astype(input_dtype)          # e.g. bf16: halves kernel-side x DMA

    if num_l_blocks == 1:
        # Pad the lane axis to a multiple of 128 so the output store is an
        # unmasked, lane-dense vst; pad columns are sliced off below.
        Lpad = ((L + 127) // 128) * 128
        if Lpad != L:
            xT = jnp.pad(xT, ((0, 0), (0, Lpad - L)))
        Lblk = Lpad
    else:
        assert L % num_l_blocks == 0, "num_l_blocks must divide B*T"
        Lblk = L // num_l_blocks
        assert Lblk % 128 == 0, "lane blocks must be multiples of 128"
        assert Lblk % T == 0, "lane blocks must hold whole time segments"
        Lpad = L

    kernel = functools.partial(
        _attention2d_freq_kernel, k1=k1, k2=k2, hidden=hidden, nb=nb,
        seg_len=T, inv_temp=1.0 / float(temperature), compute_dtype=compute_dtype)

    cp_kwargs = dict(dimension_semantics=("parallel",))
    if vmem_limit_bytes is not None:
        # v7x guidance: keep 2 * CF*Lblk*esize well under 64 MiB; v5e/v6e: 128 MiB.
        cp_kwargs["vmem_limit_bytes"] = vmem_limit_bytes

    cost = pl.CostEstimate(
        flops=2 * Lpad * (k1 * hidden * CF + k2 * nb * hidden),
        transcendentals=(nb + 1) * Lpad,
        bytes_accessed=(xT.size * xT.dtype.itemsize
                        + w1s.size * w1s.dtype.itemsize
                        + w2s.size * w2s.dtype.itemsize
                        + (b1.size + b2.size) * 4
                        + nb * Lpad * 4),
    )

    out = pl.pallas_call(
        kernel,
        out_shape=jax.ShapeDtypeStruct((nb, Lpad), jnp.float32),
        grid=(num_l_blocks,),
        in_specs=[
            pl.BlockSpec((CF, Lblk), lambda i: (0, i)),
            # constant index maps: Pallas skips re-copying unchanged blocks
            pl.BlockSpec((k1 * hidden, CF), lambda i: (0, 0)),
            pl.BlockSpec((hidden, 1), lambda i: (0, 0)),
            pl.BlockSpec((k2 * nb, hidden), lambda i: (0, 0)),
            pl.BlockSpec((nb, 1), lambda i: (0, 0)),
        ],
        out_specs=pl.BlockSpec((nb, Lblk), lambda i: (0, i)),
        compiler_params=pltpu.CompilerParams(**cp_kwargs),
        cost_estimate=cost,
    )(xT, w1s, b1, w2s, b2)

    # (nb, B*T) -> (B, nb, 1, T, 1)   (torch: .unsqueeze(2).unsqueeze(4))
    att = jnp.transpose(out[:, :L].reshape(nb, B, T), (1, 0, 2))
    return att[:, :, None, :, None]


def _reference(x, params, *, temperature, eps=1e-5):
    """Pure-JAX reference of the same forward path (independent of the kernel)."""
    xm = jnp.mean(x, axis=3)                                   # (B, C, T)
    w1, w2 = params["w1"], params["w2"]
    k1, k2 = w1.shape[-1], w2.shape[-1]
    pad1, pad2 = (k1 - 1) // 2, (k2 - 1) // 2
    y = lax.conv_general_dilated(xm, w1, (1,), [(pad1, pad1)],
                                 dimension_numbers=("NCH", "OIH", "NCH"))
    g = params["bn_gamma"][None, :, None]
    be = params["bn_beta"][None, :, None]
    mu = params["bn_mean"][None, :, None]
    va = params["bn_var"][None, :, None]
    y = (y - mu) / jnp.sqrt(va + eps) * g + be
    y = jnp.maximum(y, 0.0)
    z = lax.conv_general_dilated(y, w2, (1,), [(pad2, pad2)],
                                 dimension_numbers=("NCH", "OIH", "NCH"))
    z = z + params["b2"][None, :, None]
    att = jax.nn.softmax(z / temperature, axis=1)
    return att[:, :, None, :, None]


if __name__ == "__main__":
    # module config: attention2d(in_planes=16, kernel_size=(3,3), freq_size=16,
    #                            stride=1, n_basis_kernels=4, temperature=31,
    #                            reduction=4, pool_dim='freq', pool_type='avg')
    B, C, T, F = 2, 16, 16, 16
    kernel_size = (3, 3)
    n_basis = 4
    reduction = 4
    temperature = 31.0
    hidden = max(C // reduction, 4)

    key = jax.random.PRNGKey(0)
    k_x, k_w1, k_w2, k_m, k_v = jax.random.split(key, 5)

    x = jax.random.normal(k_x, (B, C, T, F), jnp.float32)

    # deterministic parameter init (kaiming_normal fan_out / relu, like the module)
    fan_out1 = hidden * kernel_size[0]
    w1 = jax.random.normal(k_w1, (hidden, C, kernel_size[0]), jnp.float32) * jnp.sqrt(2.0 / fan_out1)
    fan_out2 = n_basis * kernel_size[1]
    w2 = jax.random.normal(k_w2, (n_basis, hidden, kernel_size[1]), jnp.float32) * jnp.sqrt(2.0 / fan_out2)
    b2 = jnp.zeros((n_basis,), jnp.float32)                 # nn.init.constant_(bias, 0)
    bn_gamma = jnp.ones((hidden,), jnp.float32)             # nn.init.constant_(weight, 1)
    bn_beta = jnp.zeros((hidden,), jnp.float32)             # nn.init.constant_(bias, 0)
    bn_mean = 0.1 * jax.random.normal(k_m, (hidden,), jnp.float32)
    bn_var = 1.0 + 0.1 * jax.nn.softplus(jax.random.normal(k_v, (hidden,), jnp.float32))

    params = dict(w1=w1, w2=w2, b2=b2, bn_gamma=bn_gamma, bn_beta=bn_beta,
                  bn_mean=bn_mean, bn_var=bn_var)

    # Tolerances account for the approximate EUP reciprocal used in the softmax
    # normalization (and, where used, bf16-rounded matmul operands / inputs).
    TOL = dict(rtol=5e-3, atol=5e-3)

    # 1) sensitive correctness check (sharp softmax at temperature=1.0):
    #    use f32 MXU operands so bf16 rounding cannot perturb the sharp softmax.
    out1 = jax.block_until_ready(
        attention2d_freq(x, params, temperature=1.0, compute_dtype=jnp.float32))
    ref1 = _reference(x, params, temperature=1.0)
    assert out1.shape == (B, n_basis, 1, T, 1), out1.shape
    assert jnp.allclose(out1, ref1, **TOL), "kernel/reference mismatch (T=1.0)"

    # 2) module-config run (temperature=31, default bf16 MXU operands / f32 accum)
    out = jax.block_until_ready(attention2d_freq(x, params, temperature=temperature))
    ref = _reference(x, params, temperature=temperature)
    assert out.shape == (B, n_basis, 1, T, 1), out.shape
    assert jnp.allclose(out, ref, **TOL), "kernel/reference mismatch (T=31)"

    # 3) bf16-input variant (halves kernel-side HBM->VMEM traffic for x; math
    #    accumulates in f32)
    out_bf16 = jax.block_until_ready(
        attention2d_freq(x, params, temperature=temperature,
                         input_dtype=jnp.bfloat16))
    assert jnp.allclose(out_bf16, ref, **TOL), "kernel/reference mismatch (bf16 input)"

    print("KERNEL_OK")
</pallas_src>

<mosaic_0001>
module attributes {stable_mosaic.version = 11 : i64} {
  func.func @_attention2d_freq_kernel(%arg0: i32, %arg1: memref<256x128xf32, #tpu.memory_space<vmem>>, %arg2: memref<12x256xf32, #tpu.memory_space<vmem>>, %arg3: memref<4x1xf32, #tpu.memory_space<vmem>>, %arg4: memref<12x4xf32, #tpu.memory_space<vmem>>, %arg5: memref<4x1xf32, #tpu.memory_space<vmem>>, %arg6: memref<4x128xf32, #tpu.memory_space<vmem>>) attributes {dimension_semantics = [#tpu.dimension_semantics<parallel>], iteration_bounds = array<i64: 1>, scalar_prefetch = 0 : i64, scratch_operands = 0 : i64, tpu.core_type = #tpu.core_type<tc>, window_params = [{transform_indices = @transform_0, window_bounds = array<i64: 256, 128>}, {pipeline_mode = #tpu.pipeline_mode<synchronous>, transform_indices = @transform_1, window_bounds = array<i64: 12, 256>}, {pipeline_mode = #tpu.pipeline_mode<synchronous>, transform_indices = @transform_2, window_bounds = array<i64: 4, 1>}, {pipeline_mode = #tpu.pipeline_mode<synchronous>, transform_indices = @transform_3, window_bounds = array<i64: 12, 4>}, {pipeline_mode = #tpu.pipeline_mode<synchronous>, transform_indices = @transform_4, window_bounds = array<i64: 4, 1>}, {transform_indices = @transform_5, window_bounds = array<i64: 4, 128>}]} {
    %0 = tpu.iota {dimensions = array<i32: 1>} : vector<1x128xi32>
    %c16_i32 = arith.constant 16 : i32
    %c0_i32 = arith.constant 0 : i32
    %1 = arith.cmpi eq, %c16_i32, %c0_i32 : i32
    %c1_i32 = arith.constant 1 : i32
    %2 = arith.select %1, %c1_i32, %c16_i32 : i32
    %3 = vector.broadcast %2 : i32 to vector<1x128xi32>
    %4 = arith.remsi %0, %3 : vector<1x128xi32>
    %c0_i32_0 = arith.constant 0 : i32
    %5 = vector.broadcast %c0_i32_0 : i32 to vector<1x128xi32>
    %6 = arith.cmpi ne, %4, %5 : vector<1x128xi32>
    %c0_i32_1 = arith.constant 0 : i32
    %7 = vector.broadcast %c0_i32_1 : i32 to vector<1x128xi32>
    %8 = arith.cmpi slt, %4, %7 : vector<1x128xi32>
    %c0_i32_2 = arith.constant 0 : i32
    %9 = arith.cmpi slt, %2, %c0_i32_2 : i32
    %10 = vector.broadcast %9 : i1 to vector<1x128xi1>
    %11 = vector.broadcast %10 : vector<1x128xi1> to vector<1x128xi1>
    %12 = arith.xori %8, %11 : vector<1x128xi1>
    %13 = arith.andi %12, %6 : vector<1x128xi1>
    %14 = vector.broadcast %2 : i32 to vector<1x128xi32>
    %15 = arith.addi %4, %14 : vector<1x128xi32>
    %16 = arith.select %13, %15, %4 : vector<1x128xi1>, vector<1x128xi32>
    %c-1_i32 = arith.constant -1 : i32
    %17 = vector.broadcast %c-1_i32 : i32 to vector<1x128xi32>
    %18 = arith.addi %16, %17 : vector<1x128xi32>
    %c0_i32_3 = arith.constant 0 : i32
    %19 = vector.broadcast %c0_i32_3 : i32 to vector<1x128xi32>
    %20 = arith.cmpi sge, %18, %19 : vector<1x128xi32>
    %c-1_i32_4 = arith.constant -1 : i32
    %21 = vector.broadcast %c-1_i32_4 : i32 to vector<1x128xi32>
    %22 = arith.addi %16, %21 : vector<1x128xi32>
    %c16_i32_5 = arith.constant 16 : i32
    %23 = vector.broadcast %c16_i32_5 : i32 to vector<1x128xi32>
    %24 = arith.cmpi slt, %22, %23 : vector<1x128xi32>
    %25 = arith.andi %20, %24 : vector<1x128xi1>
    %c1_i32_6 = arith.constant 1 : i32
    %26 = vector.broadcast %c1_i32_6 : i32 to vector<1x128xi32>
    %27 = arith.addi %16, %26 : vector<1x128xi32>
    %c0_i32_7 = arith.constant 0 : i32
    %28 = vector.broadcast %c0_i32_7 : i32 to vector<1x128xi32>
    %29 = arith.cmpi sge, %27, %28 : vector<1x128xi32>
    %c1_i32_8 = arith.constant 1 : i32
    %30 = vector.broadcast %c1_i32_8 : i32 to vector<1x128xi32>
    %31 = arith.addi %16, %30 : vector<1x128xi32>
    %c16_i32_9 = arith.constant 16 : i32
    %32 = vector.broadcast %c16_i32_9 : i32 to vector<1x128xi32>
    %33 = arith.cmpi slt, %31, %32 : vector<1x128xi32>
    %34 = arith.andi %29, %33 : vector<1x128xi1>
    %c0 = arith.constant 0 : index
    %c0_10 = arith.constant 0 : index
    %35 = vector.load %arg1[%c0, %c0_10] : memref<256x128xf32, #tpu.memory_space<vmem>>, vector<256x128xf32>
    %c0_11 = arith.constant 0 : index
    %c0_12 = arith.constant 0 : index
    %36 = vector.load %arg2[%c0_11, %c0_12] : memref<12x256xf32, #tpu.memory_space<vmem>>, vector<12x256xf32>
    %cst = arith.constant dense<0.000000e+00> : vector<12x128xf32>
    %37 = tpu.matmul %36, %35, %cst {dimension_numbers = #tpu.dot_dimension_numbers<[1], [0], [0], [1], [0, 0, 1, 1], [], []>} : vector<12x256xf32>, vector<256x128xf32>, vector<12x128xf32> -> vector<12x128xf32>
    %38 = vector.extract_strided_slice %37 {offsets = [4, 0], sizes = [4, 128], strides = [1, 1]} : vector<12x128xf32> to vector<4x128xf32>
    %39 = vector.extract_strided_slice %37 {offsets = [0, 0], sizes = [4, 128], strides = [1, 1]} : vector<12x128xf32> to vector<4x128xf32>
    %c1_i32_13 = arith.constant 1 : i32
    %40 = tpu.dynamic_rotate %39 by %c1_i32_13 dim 1 : vector<4x128xf32>, i32 -> vector<4x128xf32>
    %cst_14 = arith.constant 0.000000e+00 : f32
    %41 = vector.shape_cast %25 : vector<1x128xi1> to vector<1x128xi1>
    %42 = vector.broadcast %41 : vector<1x128xi1> to vector<4x128xi1>
    %43 = vector.broadcast %cst_14 : f32 to vector<4x128xf32>
    %44 = arith.select %42, %40, %43 : vector<4x128xi1>, vector<4x128xf32>
    %45 = arith.addf %38, %44 : vector<4x128xf32>
    %46 = vector.extract_strided_slice %37 {offsets = [8, 0], sizes = [4, 128], strides = [1, 1]} : vector<12x128xf32> to vector<4x128xf32>
    %c127_i32 = arith.constant 127 : i32
    %47 = tpu.dynamic_rotate %46 by %c127_i32 dim 1 : vector<4x128xf32>, i32 -> vector<4x128xf32>
    %cst_15 = arith.constant 0.000000e+00 : f32
    %48 = vector.shape_cast %34 : vector<1x128xi1> to vector<1x128xi1>
    %49 = vector.broadcast %48 : vector<1x128xi1> to vector<4x128xi1>
    %50 = vector.broadcast %cst_15 : f32 to vector<4x128xf32>
    %51 = arith.select %49, %47, %50 : vector<4x128xi1>, vector<4x128xf32>
    %52 = arith.addf %45, %51 : vector<4x128xf32>
    %c0_16 = arith.constant 0 : index
    %c0_17 = arith.constant 0 : index
    %53 = vector.load %arg3[%c0_16, %c0_17] : memref<4x1xf32, #tpu.memory_space<vmem>>, vector<4x1xf32>
    %54 = vector.broadcast %53 : vector<4x1xf32> to vector<4x128xf32>
    %55 = arith.addf %52, %54 : vector<4x128xf32>
    %cst_18 = arith.constant 0.000000e+00 : f32
    %56 = vector.broadcast %cst_18 : f32 to vector<4x128xf32>
    %57 = arith.maximumf %55, %56 : vector<4x128xf32>
    %c0_19 = arith.constant 0 : index
    %c0_20 = arith.constant 0 : index
    %58 = vector.load %arg4[%c0_19, %c0_20] : memref<12x4xf32, #tpu.memory_space<vmem>>, vector<12x4xf32>
    %cst_21 = arith.constant dense<0.000000e+00> : vector<12x128xf32>
    %59 = tpu.matmul %58, %57, %cst_21 {dimension_numbers = #tpu.dot_dimension_numbers<[1], [0], [0], [1], [0, 0, 1, 1], [], []>} : vector<12x4xf32>, vector<4x128xf32>, vector<12x128xf32> -> vector<12x128xf32>
    %60 = vector.extract_strided_slice %59 {offsets = [4, 0], sizes = [4, 128], strides = [1, 1]} : vector<12x128xf32> to vector<4x128xf32>
    %61 = vector.extract_strided_slice %59 {offsets = [0, 0], sizes = [4, 128], strides = [1, 1]} : vector<12x128xf32> to vector<4x128xf32>
    %c1_i32_22 = arith.constant 1 : i32
    %62 = tpu.dynamic_rotate %61 by %c1_i32_22 dim 1 : vector<4x128xf32>, i32 -> vector<4x128xf32>
    %cst_23 = arith.constant 0.000000e+00 : f32
    %63 = vector.shape_cast %25 : vector<1x128xi1> to vector<1x128xi1>
    %64 = vector.broadcast %63 : vector<1x128xi1> to vector<4x128xi1>
    %65 = vector.broadcast %cst_23 : f32 to vector<4x128xf32>
    %66 = arith.select %64, %62, %65 : vector<4x128xi1>, vector<4x128xf32>
    %67 = arith.addf %60, %66 : vector<4x128xf32>
    %68 = vector.extract_strided_slice %59 {offsets = [8, 0], sizes = [4, 128], strides = [1, 1]} : vector<12x128xf32> to vector<4x128xf32>
    %c127_i32_24 = arith.constant 127 : i32
    %69 = tpu.dynamic_rotate %68 by %c127_i32_24 dim 1 : vector<4x128xf32>, i32 -> vector<4x128xf32>
    %cst_25 = arith.constant 0.000000e+00 : f32
    %70 = vector.shape_cast %34 : vector<1x128xi1> to vector<1x128xi1>
    %71 = vector.broadcast %70 : vector<1x128xi1> to vector<4x128xi1>
    %72 = vector.broadcast %cst_25 : f32 to vector<4x128xf32>
    %73 = arith.select %71, %69, %72 : vector<4x128xi1>, vector<4x128xf32>
    %74 = arith.addf %67, %73 : vector<4x128xf32>
    %c0_26 = arith.constant 0 : index
    %c0_27 = arith.constant 0 : index
    %75 = vector.load %arg5[%c0_26, %c0_27] : memref<4x1xf32, #tpu.memory_space<vmem>>, vector<4x1xf32>
    %76 = vector.broadcast %75 : vector<4x1xf32> to vector<4x128xf32>
    %77 = arith.addf %74, %76 : vector<4x128xf32>
    %cst_28 = arith.constant 1.000000e+00 : f32
    %78 = vector.broadcast %cst_28 : f32 to vector<4x128xf32>
    %79 = arith.mulf %77, %78 : vector<4x128xf32>
    %cst_29 = arith.constant dense<0xFF800000> : vector<128xf32>
    %80 = vector.multi_reduction <maximumf>, %79, %cst_29 [0] : vector<4x128xf32> to vector<128xf32>
    %81 = vector.shape_cast %80 : vector<128xf32> to vector<1x128xf32>
    %82 = vector.broadcast %81 : vector<1x128xf32> to vector<4x128xf32>
    %83 = arith.subf %79, %82 : vector<4x128xf32>
    %84 = math.exp %83 : vector<4x128xf32>
    %cst_30 = arith.constant dense<0.000000e+00> : vector<128xf32>
    %85 = vector.multi_reduction <add>, %84, %cst_30 [0] : vector<4x128xf32> to vector<128xf32>
    %86 = vector.shape_cast %85 : vector<128xf32> to vector<1x128xf32>
    %87 = tpu.reciprocal %86 {approx = true} : vector<1x128xf32> -> vector<1x128xf32>
    %88 = vector.broadcast %87 : vector<1x128xf32> to vector<4x128xf32>
    %89 = arith.mulf %84, %88 : vector<4x128xf32>
    %c0_31 = arith.constant 0 : index
    %c0_32 = arith.constant 0 : index
    %90 = vector.load %arg6[%c0_31, %c0_32] : memref<4x128xf32, #tpu.memory_space<vmem>>, vector<4x128xf32>
    tpu.vector_store %arg6[%c0_31, %c0_32], %89 {strides = array<i32>} : memref<4x128xf32, #tpu.memory_space<vmem>>, vector<4x128xf32>,
    return
  }
  func.func @transform_0(%arg0: i32) -> (i32, i32) {
    %c0_i32 = arith.constant 0 : i32
    %c0_i32_0 = arith.constant 0 : i32
    return %c0_i32, %arg0 : i32, i32
  }
  func.func @transform_1(%arg0: i32) -> (i32, i32) {
    %c0_i32 = arith.constant 0 : i32
    %c0_i32_0 = arith.constant 0 : i32
    %c0_i32_1 = arith.constant 0 : i32
    return %c0_i32, %c0_i32_0 : i32, i32
  }
  func.func @transform_2(%arg0: i32) -> (i32, i32) {
    %c0_i32 = arith.constant 0 : i32
    %c0_i32_0 = arith.constant 0 : i32
    %c0_i32_1 = arith.constant 0 : i32
    return %c0_i32, %c0_i32_0 : i32, i32
  }
  func.func @transform_3(%arg0: i32) -> (i32, i32) {
    %c0_i32 = arith.constant 0 : i32
    %c0_i32_0 = arith.constant 0 : i32
    %c0_i32_1 = arith.constant 0 : i32
    return %c0_i32, %c0_i32_0 : i32, i32
  }
  func.func @transform_4(%arg0: i32) -> (i32, i32) {
    %c0_i32 = arith.constant 0 : i32
    %c0_i32_0 = arith.constant 0 : i32
    %c0_i32_1 = arith.constant 0 : i32
    return %c0_i32, %c0_i32_0 : i32, i32
  }
  func.func @transform_5(%arg0: i32) -> (i32, i32) {
    %c0_i32 = arith.constant 0 : i32
    %c0_i32_0 = arith.constant 0 : i32
    return %c0_i32, %arg0 : i32, i32
  }
}

</mosaic_0001>

<llo_original>
// kernel: tpu_custom_call.1
$region0: #{tpu_custom_call.1}
  #allocation0 [shape = 'u32[]', space=smem, size = 0x4, offset = 0x4, fixed_abs, tag = 'smem constant byte address 0x4 - core index']
  #allocation1 [shape = 'u32[144,128]{1,0:T(1,128)}', space=vmem, size = 0x12000, scoped, tag = 'internal scratch']
  %s0 = inlined_call_operand.hbm [shape: f32[256,128], index: 0, kind: input, shape index: {}]
  %s1 = inlined_call_operand.hbm [shape: f32[12,256], index: 1, kind: input, shape index: {}]
  %s2 = inlined_call_operand.vmem [shape: f32[4,1], index: 2, kind: input, shape index: {}]
  %s3 = inlined_call_operand.vmem [shape: f32[12,4], index: 3, kind: input, shape index: {}]
  %s4 = inlined_call_operand.vmem [shape: f32[4,1], index: 4, kind: input, shape index: {}]
  %s5 = inlined_call_operand.hbm [shape: f32[4,128], index: 5, kind: output, shape index: {}]
  %s6 = sld [smem:[#allocation0]]
  $region38: #{tpu_custom_call.1} parent=0
    _
  %s8 = ssub.s32 1, %s6
  %s9 = scalar_select 0, %s8, %s6
  $region1: #{tpu_custom_call.1} parent=0
    #allocation2 [shape = 'u8[131072]{0}', space=vmem, size = 0x20000, scoped, tag = 'input window, operand 0, single buffered']
    #allocation3 [shape = 's32[1]{0}', space=sflag, size = 0x4, scoped, tag = 'scoped memory for tpu_custom_call.1']
    #allocation4 [shape = 's32[1]{0}', space=sflag, size = 0x4, scoped, tag = 'scoped memory for tpu_custom_call.1']
    #allocation5 [shape = 'u8[16384]{0}', space=vmem, size = 0x4000, scoped, tag = 'input window, operand 1, single buffered']
    #allocation6 [shape = 's32[1]{0}', space=sflag, size = 0x4, scoped, tag = 'scoped memory for tpu_custom_call.1']
    #allocation7 [shape = 'u8[2048]{0}', space=vmem, size = 0x800, scoped, tag = 'output window, operand 0, single buffered']
    %10 = vsyncpa [#allocation3], 0
    %11 = vsyncpa [#allocation6], 0
    %12 = vsyncpa [#allocation4], 0
    // Predicated region
    $region2: #{tpu_custom_call.1} parent=1 // pred_check
      _
    $region3: #{tpu_custom_call.1} parent=1 // pred_check_branch
      %14 = sbr.rel (0) target = $region5
    $region4: #{tpu_custom_call.1} parent=1 // pred_region
      %s16 = ssub.s32 4096, 4096
      %17 = vsyncadd [#allocation3], %s16
      %s18 = sshll.u32 [#allocation2], 4
      %s19 = int_to_ptr.vmem [resolvable:$true] %s18
      %24 = dma.hbm_to_vmem [thread:$0]  %s0, 4096, %s19, [#allocation3], 128, 128, 8
    $region5: #{tpu_custom_call.1} parent=1 // pred_fallthru
      _
    // Predicated region
    $region6: #{tpu_custom_call.1} parent=1 // pred_check
      _
    $region7: #{tpu_custom_call.1} parent=1 // pred_check_branch
      %26 = sbr.rel (0) target = $region9
    $region8: #{tpu_custom_call.1} parent=1 // pred_region
      %s28 = ssub.s32 512, 512
      %29 = vsyncadd [#allocation6], %s28
      %s30 = sshll.u32 [#allocation5], 4
      %s31 = int_to_ptr.vmem [resolvable:$true] %s30
      %36 = dma.hbm_to_vmem [thread:$0]  %s1, 512, %s31, [#allocation6], 256, 256, 16
    $region9: #{tpu_custom_call.1} parent=1 // pred_fallthru
      _
    // Predicated region
    $region10: #{tpu_custom_call.1} parent=1 // pred_check
      _
    $region11: #{tpu_custom_call.1} parent=1 // pred_check_branch
      %38 = sbr.rel (0) target = $region13
    $region12: #{tpu_custom_call.1} parent=1 // pred_region
      _
    $region13: #{tpu_custom_call.1} parent=1 // pred_fallthru
      _
    // Predicated region
    $region14: #{tpu_custom_call.1} parent=1 // pred_check
      _
    $region15: #{tpu_custom_call.1} parent=1 // pred_check_branch
      %40 = sbr.rel (0) target = $region17
    $region16: #{tpu_custom_call.1} parent=1 // pred_region
      _
    $region17: #{tpu_custom_call.1} parent=1 // pred_fallthru
      _
    // Predicated region
    $region18: #{tpu_custom_call.1} parent=1 // pred_check
      _
    $region19: #{tpu_custom_call.1} parent=1 // pred_check_branch
      %42 = sbr.rel (0) target = $region21
    $region20: #{tpu_custom_call.1} parent=1 // pred_region
      _
    $region21: #{tpu_custom_call.1} parent=1 // pred_fallthru
      _
    // Predicated region
    $region22: #{tpu_custom_call.1} parent=1 // pred_check
      _
    $region23: #{tpu_custom_call.1} parent=1 // pred_check_branch
      %44 = sbr.rel (0) target = $region25
    $region24: #{tpu_custom_call.1} parent=1 // pred_region
      %45 = dma.done [#allocation3], 4096
    $region25: #{tpu_custom_call.1} parent=1 // pred_fallthru
      _
    // Predicated region
    $region26: #{tpu_custom_call.1} parent=1 // pred_check
      _
    $region27: #{tpu_custom_call.1} parent=1 // pred_check_branch
      %47 = sbr.rel (0) target = $region29
    $region28: #{tpu_custom_call.1} parent=1 // pred_region
      %48 = dma.done [#allocation6], 512
    $region29: #{tpu_custom_call.1} parent=1 // pred_fallthru
      _
    %v49 = vlaneseq
    %v50 = vand.u32 %v49, 127
    %vm51 = vcmp.lt.s32.totalorder %v50, 0
    %v52 = vsub.s32 0, %v50
    %v53 = vsel %vm51, %v52, %v50
    %v54 = vshrl.u32 %v53, 4
    %v55 = vand.u32 %v53, 15
    %v56 = vsub.s32 0, %v55
    %v57 = vsel %vm51, %v56, %v55
    %vm58 = vcmp.ne.s32.totalorder %v57, 0
    %vm59 = vcmp.lt.s32.totalorder %v57, 0
    %vm60 = vmand %vm59, %vm58
    %v61 = vadd.s32 %v57, 16
    %v62 = vsel %vm60, %v61, %v57
    %v63 = vadd.s32 %v62, 4294967295
    %vm64 = vcmp.ge.s32.totalorder %v63, 0
    %vm65 = vcmp.lt.s32.totalorder %v63, 16
    %vm66 = vmand %vm64, %vm65
    %v67 = vadd.s32 %v62, 1
    %vm68 = vcmp.ge.s32.totalorder %v67, 0
    %vm69 = vcmp.lt.s32.totalorder %v67, 16
    %vm70 = vmand %vm68, %vm69
    %v71 = vld [vmem:[#allocation2] sm:$0xff]
    %v72 = vld [vmem:[#allocation2 + $0x8] sm:$0xff]
    %v73 = vld [vmem:[#allocation2 + $0x10] sm:$0xff]
    %v74 = vld [vmem:[#allocation2 + $0x18] sm:$0xff]
    %v75 = vld [vmem:[#allocation2 + $0x20] sm:$0xff]
    %v76 = vld [vmem:[#allocation2 + $0x28] sm:$0xff]
    %v77 = vld [vmem:[#allocation2 + $0x30] sm:$0xff]
    %v78 = vld [vmem:[#allocation2 + $0x38] sm:$0xff]
    %v79 = vld [vmem:[#allocation2 + $0x40] sm:$0xff]
    %v80 = vld [vmem:[#allocation2 + $0x48] sm:$0xff]
    %v81 = vld [vmem:[#allocation2 + $0x50] sm:$0xff]
    %v82 = vld [vmem:[#allocation2 + $0x58] sm:$0xff]
    %v83 = vld [vmem:[#allocation2 + $0x60] sm:$0xff]
    %v84 = vld [vmem:[#allocation2 + $0x68] sm:$0xff]
    %v85 = vld [vmem:[#allocation2 + $0x70] sm:$0xff]
    %v86 = vld [vmem:[#allocation2 + $0x78] sm:$0xff]
    %v87 = vld [vmem:[#allocation2 + $0x80] sm:$0xff]
    %v88 = vld [vmem:[#allocation2 + $0x88] sm:$0xff]
    %v89 = vld [vmem:[#allocation2 + $0x90] sm:$0xff]
    %v90 = vld [vmem:[#allocation2 + $0x98] sm:$0xff]
    %v91 = vld [vmem:[#allocation2 + $0xa0] sm:$0xff]
    %v92 = vld [vmem:[#allocation2 + $0xa8] sm:$0xff]
    %v93 = vld [vmem:[#allocation2 + $0xb0] sm:$0xff]
    %v94 = vld [vmem:[#allocation2 + $0xb8] sm:$0xff]
    %v95 = vld [vmem:[#allocation2 + $0xc0] sm:$0xff]
    %v96 = vld [vmem:[#allocation2 + $0xc8] sm:$0xff]
    %v97 = vld [vmem:[#allocation2 + $0xd0] sm:$0xff]
    %v98 = vld [vmem:[#allocation2 + $0xd8] sm:$0xff]
    %v99 = vld [vmem:[#allocation2 + $0xe0] sm:$0xff]
    %v100 = vld [vmem:[#allocation2 + $0xe8] sm:$0xff]
    %v101 = vld [vmem:[#allocation2 + $0xf0] sm:$0xff]
    %v102 = vld [vmem:[#allocation2 + $0xf8] sm:$0xff]
    %v103 = vld [vmem:[#allocation5] sm:$0xff]
    %v104 = vld [vmem:[#allocation5 + $0x8] sm:$0xff]
    %v105 = vld [vmem:[#allocation5 + $0x10] sm:$0xf]
    %v106 = vld [vmem:[#allocation5 + $0x18] sm:$0xf]
    %107 = vmatprep.subr.mxu0 0.0
    %108 = vmatpush1.msra.mxu0 %v86
    %109 = vmatprep.subr.mxu0 0.0
    %110 = vmatpush1.msra.mxu0 %v85
    %111 = vmatprep.subr.mxu0 0.0
    %112 = vmatpush1.msra.mxu0 %v84
    %113 = vmatprep.subr.mxu0 0.0
    %114 = vmatpush1.msra.mxu0 %v83
    %115 = vmatprep.subr.mxu0 0.0
    %116 = vmatpush1.msra.mxu0 %v82
    %117 = vmatprep.subr.mxu0 0.0
    %118 = vmatpush1.msra.mxu0 %v81
    %119 = vmatprep.subr.mxu0 0.0
    %120 = vmatpush1.msra.mxu0 %v80
    %121 = vmatprep.subr.mxu0 0.0
    %122 = vmatpush1.msra.mxu0 %v79
    %123 = vmatprep.subr.mxu0 0.0
    %124 = vmatpush1.msra.mxu0 %v78
    %125 = vmatprep.subr.mxu0 0.0
    %126 = vmatpush1.msra.mxu0 %v77
    %127 = vmatprep.subr.mxu0 0.0
    %128 = vmatpush1.msra.mxu0 %v76
    %129 = vmatprep.subr.mxu0 0.0
    %130 = vmatpush1.msra.mxu0 %v75
    %131 = vmatprep.subr.mxu0 0.0
    %132 = vmatpush1.msra.mxu0 %v74
    %133 = vmatprep.subr.mxu0 0.0
    %134 = vmatpush1.msra.mxu0 %v73
    %135 = vmatprep.subr.mxu0 0.0
    %136 = vmatpush1.msra.mxu0 %v72
    %137 = vmatprep.subr.mxu0 0.0
    %138 = vmatpush1.msra.mxu0 %v71
    %139 = vmatprep.subr.mxu0 0.0
    %140 = vmatpush2.msra.mxu0 %v102
    %141 = vmatprep.subr.mxu0 0.0
    %142 = vmatpush2.msra.mxu0 %v101
    %143 = vmatprep.subr.mxu0 0.0
    %144 = vmatpush2.msra.mxu0 %v100
    %145 = vmatprep.subr.mxu0 0.0
    %146 = vmatpush2.msra.mxu0 %v99
    %147 = vmatprep.subr.mxu0 0.0
    %148 = vmatpush2.msra.mxu0 %v98
    %149 = vmatprep.subr.mxu0 0.0
    %150 = vmatpush2.msra.mxu0 %v97
    %151 = vmatprep.subr.mxu0 0.0
    %152 = vmatpush2.msra.mxu0 %v96
    %153 = vmatprep.subr.mxu0 0.0
    %154 = vmatpush2.msra.mxu0 %v95
    %155 = vmatprep.subr.mxu0 0.0
    %156 = vmatpush2.msra.mxu0 %v94
    %157 = vmatprep.subr.mxu0 0.0
    %158 = vmatpush2.msra.mxu0 %v93
    %159 = vmatprep.subr.mxu0 0.0
    %160 = vmatpush2.msra.mxu0 %v92
    %161 = vmatprep.subr.mxu0 0.0
    %162 = vmatpush2.msra.mxu0 %v91
    %163 = vmatprep.subr.mxu0 0.0
    %164 = vmatpush2.msra.mxu0 %v90
    %165 = vmatprep.subr.mxu0 0.0
    %166 = vmatpush2.msra.mxu0 %v89
    %167 = vmatprep.subr.mxu0 0.0
    %168 = vmatpush2.msra.mxu0 %v88
    %169 = vmatprep.subr.mxu0 0.0
    %170 = vmatpush2.msra.mxu0 %v87
    %171 = vmatprep.mubr.f32.mxu0 %v104
    %172 = vmatmul.mubr.f32.gmra.mxu0 %v103
    %v173 = vpop.f32.mrf.mxu0
    %v174 = vadd.f32 0.0, %v173
    %v175 = vpop.f32.mrf.mxu0
    %176 = vmatprep.mubr.f32.mxu0 %v106
    %177 = vmatmul.mubr.f32.gmra.mxu0 %v105
    %v178 = vpop.f32.mrf.mxu0
    %v179 = vadd.f32 0.0, %v178
    %v180 = vpop.f32.mrf.mxu0
    %181 = vdwg.mxu0
    %182 = vrot.lane.b32.xlu0 %v174, 1
    %v183 = vpop.permute.xlu0 %182
    %v184 = vsel %vm66, 1, 0
    %vm185 = vcmp.eq.s32.totalorder %v184, 1
    %v186 = vsel %vm185, %v183, 0.0
    %v188 = vrot.slane %v186, 4
    %v190 = vadd.f32 %v174, %v188
    %191 = vrot.lane.b32.xlu0 %v179, 127
    %v192 = vpop.permute.xlu0 %191
    %v193 = vsel %vm70, 1, 0
    %vm194 = vcmp.eq.s32.totalorder %v193, 1
    %v195 = vsel %vm194, %v192, 0.0
    %v197 = vrot.slane %v195, 4
    %v199 = vadd.f32 %v190, %v197
    %v200 = vld [vmem:[%s2] sm:$0xf]
    %202 = vset.pattern.permute.xlu0 0
    %203 = vperm.xlu0 %202, %v200
    %v204 = vpop.permute.xlu0 %203
    %v205 = vrot.slane %v204, 4
    %v207 = vadd.f32 %v199, %v205
    %v208 = vmax.f32 %v207, 0.0
    %v209 = vld [vmem:[%s3] sm:$0xff]
    %v210 = vld [vmem:[%s3 + $0x8] sm:$0xf]
    %v212 = vrot.slane %v208, 4
    %vm213 = vcmask 31744
    %v215 = vsel %vm213, %v209, 0
    %v218 = vsel %vm213, %v210, 0
    %vm220 = vcmask 1043456
    %v221 = vsel %vm220, %v212, 0
    %223 = vmatprep.subr.mxu0 0.0
    %224 = vmatpush1.msra.mxu0 0.0
    %225 = vmatprep.subr.mxu0 0.0
    %226 = vmatpush1.msra.mxu0 0.0
    %227 = vmatprep.subr.mxu0 0.0
    %228 = vmatpush1.msra.mxu0 0.0
    %229 = vmatprep.subr.mxu0 0.0
    %230 = vmatpush1.msra.mxu0 0.0
    %231 = vmatprep.subr.mxu0 0.0
    %232 = vmatpush1.msra.mxu0 0.0
    %233 = vmatprep.subr.mxu0 0.0
    %234 = vmatpush1.msra.mxu0 0.0
    %235 = vmatprep.subr.mxu0 0.0
    %236 = vmatpush1.msra.mxu0 0.0
    %237 = vmatprep.subr.mxu0 0.0
    %238 = vmatpush1.msra.mxu0 0.0
    %239 = vmatprep.subr.mxu0 0.0
    %240 = vmatpush1.msra.mxu0 0.0
    %241 = vmatprep.subr.mxu0 0.0
    %242 = vmatpush1.msra.mxu0 0.0
    %243 = vmatprep.subr.mxu0 0.0
    %244 = vmatpush1.msra.mxu0 0.0
    %245 = vmatprep.subr.mxu0 0.0
    %246 = vmatpush1.msra.mxu0 0.0
    %247 = vmatprep.subr.mxu0 0.0
    %248 = vmatpush1.msra.mxu0 0.0
    %249 = vmatprep.subr.mxu0 0.0
    %250 = vmatpush1.msra.mxu0 0.0
    %251 = vmatprep.subr.mxu0 0.0
    %252 = vmatpush1.msra.mxu0 0.0
    %253 = vmatprep.subr.mxu0 0.0
    %254 = vmatpush1.msra.mxu0 %v221
    %255 = vmatprep.subr.mxu0 0.0
    %256 = vmatpush2.msra.mxu0 0.0
    %257 = vmatprep.subr.mxu0 0.0
    %258 = vmatpush2.msra.mxu0 0.0
    %259 = vmatprep.subr.mxu0 0.0
    %260 = vmatpush2.msra.mxu0 0.0
    %261 = vmatprep.subr.mxu0 0.0
    %262 = vmatpush2.msra.mxu0 0.0
    %263 = vmatprep.subr.mxu0 0.0
    %264 = vmatpush2.msra.mxu0 0.0
    %265 = vmatprep.subr.mxu0 0.0
    %266 = vmatpush2.msra.mxu0 0.0
    %267 = vmatprep.subr.mxu0 0.0
    %268 = vmatpush2.msra.mxu0 0.0
    %269 = vmatprep.subr.mxu0 0.0
    %270 = vmatpush2.msra.mxu0 0.0
    %271 = vmatprep.subr.mxu0 0.0
    %272 = vmatpush2.msra.mxu0 0.0
    %273 = vmatprep.subr.mxu0 0.0
    %274 = vmatpush2.msra.mxu0 0.0
    %275 = vmatprep.subr.mxu0 0.0
    %276 = vmatpush2.msra.mxu0 0.0
    %277 = vmatprep.subr.mxu0 0.0
    %278 = vmatpush2.msra.mxu0 0.0
    %279 = vmatprep.subr.mxu0 0.0
    %280 = vmatpush2.msra.mxu0 0.0
    %281 = vmatprep.subr.mxu0 0.0
    %282 = vmatpush2.msra.mxu0 0.0
    %283 = vmatprep.subr.mxu0 0.0
    %284 = vmatpush2.msra.mxu0 0.0
    %285 = vmatprep.subr.mxu0 0.0
    %286 = vmatpush2.msra.mxu0 0.0
    %287 = vmatprep.mubr.f32.mxu0 0.0
    %288 = vmatmul.mubr.f32.gmra.mxu0 %v215
    %v289 = vpop.f32.mrf.mxu0
    %v290 = vadd.f32 0.0, %v289
    %v291 = vpop.f32.mrf.mxu0
    %292 = vmatprep.mubr.f32.mxu0 0.0
    %293 = vmatmul.mubr.f32.gmra.mxu0 %v218
    %v294 = vpop.f32.mrf.mxu0
    %v295 = vadd.f32 0.0, %v294
    %v296 = vpop.f32.mrf.mxu0
    %297 = vdwg.mxu0
    %298 = vrot.lane.b32.xlu0 %v290, 1
    %v299 = vpop.permute.xlu0 %298
    %v300 = vsel %vm185, %v299, 0.0
    %v302 = vrot.slane %v300, 4
    %v304 = vadd.f32 %v290, %v302
    %305 = vrot.lane.b32.xlu0 %v295, 127
    %v306 = vpop.permute.xlu0 %305
    %v307 = vsel %vm194, %v306, 0.0
    %v309 = vrot.slane %v307, 4
    %v311 = vadd.f32 %v304, %v309
    %v312 = vld [vmem:[%s4] sm:$0xf]
    %314 = vset.pattern.permute.xlu0 0
    %315 = vperm.xlu0 %314, %v312
    %v316 = vpop.permute.xlu0 %315
    %v317 = vrot.slane %v316, 4
    %v319 = vadd.f32 %v311, %v317
    %vm320 = vcmask 1047556
    %v321 = vsel %vm320, %v319, -inf
    %v322 = vrot.slane %v321, 4
    %v323 = vmax.f32 %v321, %v322
    %v324 = vrot.slane %v323, 2
    %v325 = vmax.f32 %v323, %v324
    %v326 = vrot.slane %v325, 1
    %v327 = vmax.f32 %v325, %v326
    %v328 = vsub.f32 %v319, %v327
    %v329 = vmul.f32 %v328, 1.442695
    %v330 = vpow.pop %v329
    %v332 = vrot.slane %v330, 4
    %v334 = vsel %vm220, %v332, 0.0
    %v335 = vrot.slane %v334, 4
    %v336 = vadd.f32 %v334, %v335
    %v337 = vrot.slane %v336, 2
    %v338 = vadd.f32 %v336, %v337
    %v339 = vrot.slane %v338, 1
    %v340 = vadd.f32 %v338, %v339
    %v341 = vrcp.pop %v340
    %v342 = vmul.f32 %v330, %v341
    %343 = vst [vmem:[#allocation7 - $0x4] sm:$0xf0] %v342
    // Predicated region
    $region30: #{tpu_custom_call.1} parent=1 // pred_check
      _
    $region31: #{tpu_custom_call.1} parent=1 // pred_check_branch
      %345 = sbr.rel (0) target = $region33
    $region32: #{tpu_custom_call.1} parent=1 // pred_region
      %s347 = ssub.s32 64, 64
      %348 = vsyncadd [#allocation4], %s347
      %s350 = sshll.u32 [#allocation7], 4
      %s351 = int_to_ptr.vmem [resolvable:$true] %s350
      %353 = dma.vmem_to_hbm [thread:$0]  %s351, 64, %s5, [#allocation4]
    $region33: #{tpu_custom_call.1} parent=1 // pred_fallthru
      _
    // Predicated region
    $region34: #{tpu_custom_call.1} parent=1 // pred_check
      _
    $region35: #{tpu_custom_call.1} parent=1 // pred_check_branch
      %355 = sbr.rel (0) target = $region37
    $region36: #{tpu_custom_call.1} parent=1 // pred_region
      %356 = dma.done [#allocation4], 64
    $region37: #{tpu_custom_call.1} parent=1 // pred_fallthru
      _
    %357 = vsyncpa [#allocation3], 1
    %358 = vsyncpa [#allocation6], 1
    %359 = vsyncpa [#allocation4], 1

</llo_original>
